<compile_context>
chip_gen: v7x
topology: tpu7x:2x2x1
jax: 0.10.0
libtpu: 0.0.40
codegen_flags: <defaults>
</compile_context>

<pallas_src>
import jax
import jax.numpy as jnp
from jax.experimental import pallas as pl
from jax.experimental.pallas import tpu as pltpu


def decoder_kernel(x_ref,
                   w1_ref, b1_ref,
                   w2_ref, b2_ref,
                   w3_ref, b3_ref,
                   w4_ref, b4_ref,
                   out_ref):
    """One batch tile through all four (Linear -> ReLU) layers.

    x arrives in f32 and is cast to bf16 here (VPU cast, free relative to the
    DMA); weights are already bf16; matmuls accumulate in f32 on the MXU;
    bias-add + ReLU stay in f32 on the VPU; intermediates are cast back to
    bf16 only right before the next matmul.
    """
    h = x_ref[...].astype(jnp.bfloat16)

    h = jnp.dot(h, w1_ref[...], preferred_element_type=jnp.float32) + b1_ref[...]
    h = jnp.maximum(h, 0.0).astype(jnp.bfloat16)

    h = jnp.dot(h, w2_ref[...], preferred_element_type=jnp.float32) + b2_ref[...]
    h = jnp.maximum(h, 0.0).astype(jnp.bfloat16)

    h = jnp.dot(h, w3_ref[...], preferred_element_type=jnp.float32) + b3_ref[...]
    h = jnp.maximum(h, 0.0).astype(jnp.bfloat16)

    y = jnp.dot(h, w4_ref[...], preferred_element_type=jnp.float32) + b4_ref[...]
    out_ref[...] = jnp.maximum(y, 0.0).astype(out_ref.dtype)   # spec: ReLU on output too


def _round_up(n, m):
    return ((n + m - 1) // m) * m


def _choose_batch_tile(B):
    """Pick (TB, B_pad).

    Small B: one grid step over the whole (unpadded) batch -- the problem is a
    single MXU pass, so skip the tiling/pipelining machinery entirely.
    Large B: tiles of up to 1024 rows (multiple of 256 -> fills MXU rows on
    v6e/v7x, multiple of 16 -> bf16 sublane packing) to amortize per-step
    overhead, but keep >= 4 grid steps so v7x megacore gets >= 2 steps per TC.
    """
    if B <= 512:
        return B, B
    TB = 1024
    while TB > 256 and (B + TB - 1) // TB < 4:
        TB //= 2
    return TB, _round_up(B, TB)


@jax.jit
def decoder_forward(x, params):
    """x: [B, latent_dim] float32.
    params: dict name -> (W bf16 [in, out], b f32 [1, out]); see prepare_params."""
    w1, b1 = params["linear1"]
    w2, b2 = params["linear2"]
    w3, b3 = params["linear3"]
    w4, b4 = params["out"]

    B, latent_dim = x.shape
    out_dim = w4.shape[1]

    TB, B_pad = _choose_batch_tile(B)
    if B_pad != B:
        x = jnp.pad(x, ((0, B_pad - B), (0, 0)))   # row pad only; dtype cast is in-kernel
    grid = (B_pad // TB,)

    # x / out tiles walk the batch axis; weights & biases use a constant block
    # index so they are DMA'd once and stay VMEM-resident across grid steps.
    x_spec = pl.BlockSpec((TB, latent_dim), lambda i: (i, 0))
    out_spec = pl.BlockSpec((TB, out_dim), lambda i: (i, 0))
    resident = lambda a: pl.BlockSpec(a.shape, lambda i: (0, 0))

    y_pad = pl.pallas_call(
        decoder_kernel,
        out_shape=jax.ShapeDtypeStruct((B_pad, out_dim), jnp.float32),
        grid=grid,
        in_specs=[x_spec,
                  resident(w1), resident(b1),
                  resident(w2), resident(b2),
                  resident(w3), resident(b3),
                  resident(w4), resident(b4)],
        out_specs=out_spec,
        compiler_params=pltpu.CompilerParams(
            dimension_semantics=("parallel",)),      # v7x: shard batch tiles over 2 TCs
    )(x, w1, b1, w2, b2, w3, b3, w4, b4)

    return y_pad if B_pad == B else y_pad[:B]


def init_linear(key, in_dim, out_dim):
    # PyTorch nn.Linear default init: U[-1/sqrt(fan_in), 1/sqrt(fan_in)].
    kw, kb = jax.random.split(key)
    bound = 1.0 / jnp.sqrt(in_dim)
    w = jax.random.uniform(kw, (in_dim, out_dim), jnp.float32, -bound, bound)
    b = jax.random.uniform(kb, (1, out_dim), jnp.float32, -bound, bound)
    return w, b


def make_params(key, latent_dim, hidden_dim3, hidden_dim2, hidden_dim1, out_dim):
    k1, k2, k3, k4 = jax.random.split(key, 4)
    return {
        "linear1": init_linear(k1, latent_dim, hidden_dim3),
        "linear2": init_linear(k2, hidden_dim3, hidden_dim2),
        "linear3": init_linear(k3, hidden_dim2, hidden_dim1),
        "out":     init_linear(k4, hidden_dim1, out_dim),
    }


def prepare_params(params_f32):
    """One-time conversion to the kernel's inference layout: weights bf16
    (MXU inputs), biases f32 (VPU add). Done OUTSIDE the jitted forward so the
    casts don't run as separate small HBM ops on every call."""
    return {name: (w.astype(jnp.bfloat16), b) for name, (w, b) in params_f32.items()}


if __name__ == "__main__":
    # Decoder(latent_dim, hidden_dim3, hidden_dim2, hidden_dim1, out_dim)
    batch = 8
    latent_dim = 16
    hidden_dim3 = 64
    hidden_dim2 = 128
    hidden_dim1 = 256
    out_dim = 32

    key = jax.random.PRNGKey(0)
    k_params, k_x = jax.random.split(key)
    params_f32 = make_params(k_params, latent_dim, hidden_dim3, hidden_dim2,
                             hidden_dim1, out_dim)
    params = prepare_params(params_f32)          # one-time bf16 weight cast
    x = jax.random.normal(k_x, (batch, latent_dim), jnp.float32)

    y = decoder_forward(x, params)
    jax.block_until_ready(y)
    assert y.shape == (batch, out_dim)

    # Full-f32 reference (loose tolerance: kernel uses bf16 matmul inputs,
    # f32 accumulation keeps the error well bounded).
    def ref_f32(x, p):
        h = x
        for name in ("linear1", "linear2", "linear3", "out"):
            w, b = p[name]
            h = jnp.maximum(h @ w + b, 0.0)
        return h

    y_ref = ref_f32(x, params_f32)
    assert jnp.allclose(y, y_ref, atol=3e-2, rtol=3e-2), (
        float(jnp.max(jnp.abs(y - y_ref))))

    print("KERNEL_OK")
</pallas_src>

<mosaic_0001>
module attributes {stable_mosaic.version = 11 : i64} {
  func.func @decoder_kernel(%arg0: i32, %arg1: memref<8x16xf32, #tpu.memory_space<vmem>>, %arg2: memref<16x64xbf16, #tpu.memory_space<vmem>>, %arg3: memref<1x64xf32, #tpu.memory_space<vmem>>, %arg4: memref<64x128xbf16, #tpu.memory_space<vmem>>, %arg5: memref<1x128xf32, #tpu.memory_space<vmem>>, %arg6: memref<128x256xbf16, #tpu.memory_space<vmem>>, %arg7: memref<1x256xf32, #tpu.memory_space<vmem>>, %arg8: memref<256x32xbf16, #tpu.memory_space<vmem>>, %arg9: memref<1x32xf32, #tpu.memory_space<vmem>>, %arg10: memref<8x32xf32, #tpu.memory_space<vmem>>) attributes {dimension_semantics = [#tpu.dimension_semantics<parallel>], iteration_bounds = array<i64: 1>, scalar_prefetch = 0 : i64, scratch_operands = 0 : i64, tpu.core_type = #tpu.core_type<tc>, window_params = [{transform_indices = @transform_0, window_bounds = array<i64: 8, 16>}, {pipeline_mode = #tpu.pipeline_mode<synchronous>, transform_indices = @transform_1, window_bounds = array<i64: 16, 64>}, {pipeline_mode = #tpu.pipeline_mode<synchronous>, transform_indices = @transform_2, window_bounds = array<i64: 1, 64>}, {pipeline_mode = #tpu.pipeline_mode<synchronous>, transform_indices = @transform_3, window_bounds = array<i64: 64, 128>}, {pipeline_mode = #tpu.pipeline_mode<synchronous>, transform_indices = @transform_4, window_bounds = array<i64: 1, 128>}, {pipeline_mode = #tpu.pipeline_mode<synchronous>, transform_indices = @transform_5, window_bounds = array<i64: 128, 256>}, {pipeline_mode = #tpu.pipeline_mode<synchronous>, transform_indices = @transform_6, window_bounds = array<i64: 1, 256>}, {pipeline_mode = #tpu.pipeline_mode<synchronous>, transform_indices = @transform_7, window_bounds = array<i64: 256, 32>}, {pipeline_mode = #tpu.pipeline_mode<synchronous>, transform_indices = @transform_8, window_bounds = array<i64: 1, 32>}, {transform_indices = @transform_9, window_bounds = array<i64: 8, 32>}]} {
    %c0 = arith.constant 0 : index
    %c0_0 = arith.constant 0 : index
    %0 = vector.load %arg1[%c0, %c0_0] : memref<8x16xf32, #tpu.memory_space<vmem>>, vector<8x16xf32>
    %1 = arith.truncf %0 : vector<8x16xf32> to vector<8x16xbf16>
    %c0_1 = arith.constant 0 : index
    %c0_2 = arith.constant 0 : index
    %2 = vector.load %arg2[%c0_1, %c0_2] : memref<16x64xbf16, #tpu.memory_space<vmem>>, vector<16x64xbf16>
    %cst = arith.constant dense<0.000000e+00> : vector<8x64xf32>
    %3 = tpu.matmul %1, %2, %cst {dimension_numbers = #tpu.dot_dimension_numbers<[1], [0], [0], [1], [0, 0, 1, 1], [], []>} : vector<8x16xbf16>, vector<16x64xbf16>, vector<8x64xf32> -> vector<8x64xf32>
    %c0_3 = arith.constant 0 : index
    %c0_4 = arith.constant 0 : index
    %4 = vector.load %arg3[%c0_3, %c0_4] : memref<1x64xf32, #tpu.memory_space<vmem>>, vector<1x64xf32>
    %5 = vector.broadcast %4 : vector<1x64xf32> to vector<8x64xf32>
    %6 = arith.addf %3, %5 : vector<8x64xf32>
    %cst_5 = arith.constant 0.000000e+00 : f32
    %7 = vector.broadcast %cst_5 : f32 to vector<8x64xf32>
    %8 = arith.maximumf %6, %7 : vector<8x64xf32>
    %9 = arith.truncf %8 : vector<8x64xf32> to vector<8x64xbf16>
    %c0_6 = arith.constant 0 : index
    %c0_7 = arith.constant 0 : index
    %10 = vector.load %arg4[%c0_6, %c0_7] : memref<64x128xbf16, #tpu.memory_space<vmem>>, vector<64x128xbf16>
    %cst_8 = arith.constant dense<0.000000e+00> : vector<8x128xf32>
    %11 = tpu.matmul %9, %10, %cst_8 {dimension_numbers = #tpu.dot_dimension_numbers<[1], [0], [0], [1], [0, 0, 1, 1], [], []>} : vector<8x64xbf16>, vector<64x128xbf16>, vector<8x128xf32> -> vector<8x128xf32>
    %c0_9 = arith.constant 0 : index
    %c0_10 = arith.constant 0 : index
    %12 = vector.load %arg5[%c0_9, %c0_10] : memref<1x128xf32, #tpu.memory_space<vmem>>, vector<1x128xf32>
    %13 = vector.broadcast %12 : vector<1x128xf32> to vector<8x128xf32>
    %14 = arith.addf %11, %13 : vector<8x128xf32>
    %cst_11 = arith.constant 0.000000e+00 : f32
    %15 = vector.broadcast %cst_11 : f32 to vector<8x128xf32>
    %16 = arith.maximumf %14, %15 : vector<8x128xf32>
    %17 = arith.truncf %16 : vector<8x128xf32> to vector<8x128xbf16>
    %c0_12 = arith.constant 0 : index
    %c0_13 = arith.constant 0 : index
    %18 = vector.load %arg6[%c0_12, %c0_13] : memref<128x256xbf16, #tpu.memory_space<vmem>>, vector<128x256xbf16>
    %cst_14 = arith.constant dense<0.000000e+00> : vector<8x256xf32>
    %19 = tpu.matmul %17, %18, %cst_14 {dimension_numbers = #tpu.dot_dimension_numbers<[1], [0], [0], [1], [0, 0, 1, 1], [], []>} : vector<8x128xbf16>, vector<128x256xbf16>, vector<8x256xf32> -> vector<8x256xf32>
    %c0_15 = arith.constant 0 : index
    %c0_16 = arith.constant 0 : index
    %20 = vector.load %arg7[%c0_15, %c0_16] : memref<1x256xf32, #tpu.memory_space<vmem>>, vector<1x256xf32>
    %21 = vector.broadcast %20 : vector<1x256xf32> to vector<8x256xf32>
    %22 = arith.addf %19, %21 : vector<8x256xf32>
    %cst_17 = arith.constant 0.000000e+00 : f32
    %23 = vector.broadcast %cst_17 : f32 to vector<8x256xf32>
    %24 = arith.maximumf %22, %23 : vector<8x256xf32>
    %25 = arith.truncf %24 : vector<8x256xf32> to vector<8x256xbf16>
    %c0_18 = arith.constant 0 : index
    %c0_19 = arith.constant 0 : index
    %26 = vector.load %arg8[%c0_18, %c0_19] : memref<256x32xbf16, #tpu.memory_space<vmem>>, vector<256x32xbf16>
    %cst_20 = arith.constant dense<0.000000e+00> : vector<8x32xf32>
    %27 = tpu.matmul %25, %26, %cst_20 {dimension_numbers = #tpu.dot_dimension_numbers<[1], [0], [0], [1], [0, 0, 1, 1], [], []>} : vector<8x256xbf16>, vector<256x32xbf16>, vector<8x32xf32> -> vector<8x32xf32>
    %c0_21 = arith.constant 0 : index
    %c0_22 = arith.constant 0 : index
    %28 = vector.load %arg9[%c0_21, %c0_22] : memref<1x32xf32, #tpu.memory_space<vmem>>, vector<1x32xf32>
    %29 = vector.broadcast %28 : vector<1x32xf32> to vector<8x32xf32>
    %30 = arith.addf %27, %29 : vector<8x32xf32>
    %cst_23 = arith.constant 0.000000e+00 : f32
    %31 = vector.broadcast %cst_23 : f32 to vector<8x32xf32>
    %32 = arith.maximumf %30, %31 : vector<8x32xf32>
    %c0_24 = arith.constant 0 : index
    %c0_25 = arith.constant 0 : index
    %33 = vector.load %arg10[%c0_24, %c0_25] : memref<8x32xf32, #tpu.memory_space<vmem>>, vector<8x32xf32>
    tpu.vector_store %arg10[%c0_24, %c0_25], %32 {strides = array<i32>} : memref<8x32xf32, #tpu.memory_space<vmem>>, vector<8x32xf32>,
    return
  }
  func.func @transform_0(%arg0: i32) -> (i32, i32) {
    %c0_i32 = arith.constant 0 : i32
    %c0_i32_0 = arith.constant 0 : i32
    return %arg0, %c0_i32 : i32, i32
  }
  func.func @transform_1(%arg0: i32) -> (i32, i32) {
    %c0_i32 = arith.constant 0 : i32
    %c0_i32_0 = arith.constant 0 : i32
    %c0_i32_1 = arith.constant 0 : i32
    return %c0_i32, %c0_i32_0 : i32, i32
  }
  func.func @transform_2(%arg0: i32) -> (i32, i32) {
    %c0_i32 = arith.constant 0 : i32
    %c0_i32_0 = arith.constant 0 : i32
    %c0_i32_1 = arith.constant 0 : i32
    return %c0_i32, %c0_i32_0 : i32, i32
  }
  func.func @transform_3(%arg0: i32) -> (i32, i32) {
    %c0_i32 = arith.constant 0 : i32
    %c0_i32_0 = arith.constant 0 : i32
    %c0_i32_1 = arith.constant 0 : i32
    return %c0_i32, %c0_i32_0 : i32, i32
  }
  func.func @transform_4(%arg0: i32) -> (i32, i32) {
    %c0_i32 = arith.constant 0 : i32
    %c0_i32_0 = arith.constant 0 : i32
    %c0_i32_1 = arith.constant 0 : i32
    return %c0_i32, %c0_i32_0 : i32, i32
  }
  func.func @transform_5(%arg0: i32) -> (i32, i32) {
    %c0_i32 = arith.constant 0 : i32
    %c0_i32_0 = arith.constant 0 : i32
    %c0_i32_1 = arith.constant 0 : i32
    return %c0_i32, %c0_i32_0 : i32, i32
  }
  func.func @transform_6(%arg0: i32) -> (i32, i32) {
    %c0_i32 = arith.constant 0 : i32
    %c0_i32_0 = arith.constant 0 : i32
    %c0_i32_1 = arith.constant 0 : i32
    return %c0_i32, %c0_i32_0 : i32, i32
  }
  func.func @transform_7(%arg0: i32) -> (i32, i32) {
    %c0_i32 = arith.constant 0 : i32
    %c0_i32_0 = arith.constant 0 : i32
    %c0_i32_1 = arith.constant 0 : i32
    return %c0_i32, %c0_i32_0 : i32, i32
  }
  func.func @transform_8(%arg0: i32) -> (i32, i32) {
    %c0_i32 = arith.constant 0 : i32
    %c0_i32_0 = arith.constant 0 : i32
    %c0_i32_1 = arith.constant 0 : i32
    return %c0_i32, %c0_i32_0 : i32, i32
  }
  func.func @transform_9(%arg0: i32) -> (i32, i32) {
    %c0_i32 = arith.constant 0 : i32
    %c0_i32_0 = arith.constant 0 : i32
    return %arg0, %c0_i32 : i32, i32
  }
}

</mosaic_0001>

<llo_original>
// kernel: decoder_forward.1
$region0: #{decoder_forward.1}
  #allocation0 [shape = 'u32[]', space=smem, size = 0x4, offset = 0x4, fixed_abs, tag = 'smem constant byte address 0x4 - core index']
  #allocation1 [shape = 'u32[144,128]{1,0:T(1,128)}', space=vmem, size = 0x12000, scoped, tag = 'internal scratch']
  %s0 = inlined_call_operand.vmem [shape: f32[8,16], index: 0, kind: input, shape index: {}]
  %s1 = inlined_call_operand.vmem [shape: bf16[16,64], index: 1, kind: input, shape index: {}]
  %s2 = inlined_call_operand.hbm [shape: f32[1,64], index: 2, kind: input, shape index: {}]
  %s3 = inlined_call_operand.vmem [shape: bf16[64,128], index: 3, kind: input, shape index: {}]
  %s4 = inlined_call_operand.hbm [shape: f32[1,128], index: 4, kind: input, shape index: {}]
  %s5 = inlined_call_operand.vmem [shape: bf16[128,256], index: 5, kind: input, shape index: {}]
  %s6 = inlined_call_operand.vmem [shape: f32[1,256], index: 6, kind: input, shape index: {}]
  %s7 = inlined_call_operand.vmem [shape: bf16[256,32], index: 7, kind: input, shape index: {}]
  %s8 = inlined_call_operand.vmem [shape: f32[1,32], index: 8, kind: input, shape index: {}]
  %s9 = inlined_call_operand.hbm [shape: f32[8,32], index: 9, kind: output, shape index: {}]
  %s10 = sld [smem:[#allocation0]]
  $region54: #{decoder_forward.1} parent=0
    _
  %s12 = ssub.s32 1, %s10
  %s13 = scalar_select 0, %s12, %s10
  $region1: #{decoder_forward.1} parent=0
    #allocation2 [shape = 'u8[512]{0}', space=vmem, size = 0x400, scoped, tag = 'input window, operand 2, single buffered']
    #allocation3 [shape = 's32[1]{0}', space=sflag, size = 0x4, scoped, tag = 'scoped memory for decoder_forward.1']
    #allocation4 [shape = 's32[1]{0}', space=sflag, size = 0x4, scoped, tag = 'scoped memory for decoder_forward.1']
    #allocation5 [shape = 'u8[512]{0}', space=vmem, size = 0x400, scoped, tag = 'input window, operand 4, single buffered']
    #allocation6 [shape = 's32[1]{0}', space=sflag, size = 0x4, scoped, tag = 'scoped memory for decoder_forward.1']
    #allocation7 [shape = 'u8[4096]{0}', space=vmem, size = 0x1000, scoped, tag = 'output window, operand 0, single buffered']
    %14 = vsyncpa [#allocation3], 0
    %15 = vsyncpa [#allocation6], 0
    %16 = vsyncpa [#allocation4], 0
    // Predicated region
    $region2: #{decoder_forward.1} parent=1 // pred_check
      _
    $region3: #{decoder_forward.1} parent=1 // pred_check_branch
      %18 = sbr.rel (0) target = $region5
    $region4: #{decoder_forward.1} parent=1 // pred_region
      _
    $region5: #{decoder_forward.1} parent=1 // pred_fallthru
      _
    // Predicated region
    $region6: #{decoder_forward.1} parent=1 // pred_check
      _
    $region7: #{decoder_forward.1} parent=1 // pred_check_branch
      %20 = sbr.rel (0) target = $region9
    $region8: #{decoder_forward.1} parent=1 // pred_region
      _
    $region9: #{decoder_forward.1} parent=1 // pred_fallthru
      _
    // Predicated region
    $region10: #{decoder_forward.1} parent=1 // pred_check
      _
    $region11: #{decoder_forward.1} parent=1 // pred_check_branch
      %22 = sbr.rel (0) target = $region13
    $region12: #{decoder_forward.1} parent=1 // pred_region
      %s24 = ssub.s32 16, 16
      %25 = vsyncadd [#allocation3], %s24
      %s27 = sshll.u32 [#allocation2], 4
      %s28 = int_to_ptr.vmem [resolvable:$true] %s27
      %30 = dma.hbm_to_vmem [thread:$0]  %s2, 16, %s28, [#allocation3]
    $region13: #{decoder_forward.1} parent=1 // pred_fallthru
      _
    // Predicated region
    $region14: #{decoder_forward.1} parent=1 // pred_check
      _
    $region15: #{decoder_forward.1} parent=1 // pred_check_branch
      %32 = sbr.rel (0) target = $region17
    $region16: #{decoder_forward.1} parent=1 // pred_region
      _
    $region17: #{decoder_forward.1} parent=1 // pred_fallthru
      _
    // Predicated region
    $region18: #{decoder_forward.1} parent=1 // pred_check
      _
    $region19: #{decoder_forward.1} parent=1 // pred_check_branch
      %34 = sbr.rel (0) target = $region21
    $region20: #{decoder_forward.1} parent=1 // pred_region
      %s36 = ssub.s32 16, 16
      %37 = vsyncadd [#allocation6], %s36
      %s39 = sshll.u32 [#allocation5], 4
      %s40 = int_to_ptr.vmem [resolvable:$true] %s39
      %42 = dma.hbm_to_vmem [thread:$0]  %s4, 16, %s40, [#allocation6]
    $region21: #{decoder_forward.1} parent=1 // pred_fallthru
      _
    // Predicated region
    $region22: #{decoder_forward.1} parent=1 // pred_check
      _
    $region23: #{decoder_forward.1} parent=1 // pred_check_branch
      %44 = sbr.rel (0) target = $region25
    $region24: #{decoder_forward.1} parent=1 // pred_region
      _
    $region25: #{decoder_forward.1} parent=1 // pred_fallthru
      _
    // Predicated region
    $region26: #{decoder_forward.1} parent=1 // pred_check
      _
    $region27: #{decoder_forward.1} parent=1 // pred_check_branch
      %46 = sbr.rel (0) target = $region29
    $region28: #{decoder_forward.1} parent=1 // pred_region
      _
    $region29: #{decoder_forward.1} parent=1 // pred_fallthru
      _
    // Predicated region
    $region30: #{decoder_forward.1} parent=1 // pred_check
      _
    $region31: #{decoder_forward.1} parent=1 // pred_check_branch
      %48 = sbr.rel (0) target = $region33
    $region32: #{decoder_forward.1} parent=1 // pred_region
      _
    $region33: #{decoder_forward.1} parent=1 // pred_fallthru
      _
    // Predicated region
    $region34: #{decoder_forward.1} parent=1 // pred_check
      _
    $region35: #{decoder_forward.1} parent=1 // pred_check_branch
      %50 = sbr.rel (0) target = $region37
    $region36: #{decoder_forward.1} parent=1 // pred_region
      _
    $region37: #{decoder_forward.1} parent=1 // pred_fallthru
      _
    // Predicated region
    $region38: #{decoder_forward.1} parent=1 // pred_check
      _
    $region39: #{decoder_forward.1} parent=1 // pred_check_branch
      %52 = sbr.rel (0) target = $region41
    $region40: #{decoder_forward.1} parent=1 // pred_region
      %53 = dma.done [#allocation3], 16
    $region41: #{decoder_forward.1} parent=1 // pred_fallthru
      _
    // Predicated region
    $region42: #{decoder_forward.1} parent=1 // pred_check
      _
    $region43: #{decoder_forward.1} parent=1 // pred_check_branch
      %55 = sbr.rel (0) target = $region45
    $region44: #{decoder_forward.1} parent=1 // pred_region
      %56 = dma.done [#allocation6], 16
    $region45: #{decoder_forward.1} parent=1 // pred_fallthru
      _
    %v58 = vld [vmem:[%s0] sm:$0xff]
    %v59 = vpack.c.bf16 %v58, %v58
    %v60 = vld [vmem:[%s1] sm:$0xf]
    %v61 = vld [vmem:[%s1 + $0x4] sm:$0xf]
    %v62 = vld [vmem:[#allocation2] sm:$0x1]
    %v64 = vlaneseq
    %v65 = vshrl.u32 %v64, 7
    %v66 = vsub.s32 0, %v65
    %v67 = vrot.slane %v62, %v66
    %v71 = vunpack.c.l.b16 %v60
    %v72 = vunpack.c.l.b16 %v61
    %v73 = vpack.c.b16 %v72, %v71
    %vm75 = vcmask 130048
    %v77 = vsel %vm75, %v59, 0
    %79 = vmatprep.subr.bf16.mxu0 0
    %80 = vmatpush1.bf16.msra.mxu0 %v73
    %81 = vmatprep.subr.bf16.mxu0 0
    %82 = vmatpush1.bf16.msra.mxu0 0
    %83 = vmatprep.subr.bf16.mxu0 0
    %84 = vmatpush1.bf16.msra.mxu0 0
    %85 = vmatprep.subr.bf16.mxu0 0
    %86 = vmatpush1.bf16.msra.mxu0 0
    %87 = vmatprep.subr.bf16.mxu0 0
    %88 = vmatpush1.bf16.msra.mxu0 0
    %89 = vmatprep.subr.bf16.mxu0 0
    %90 = vmatpush1.bf16.msra.mxu0 0
    %91 = vmatprep.subr.bf16.mxu0 0
    %92 = vmatpush1.bf16.msra.mxu0 0
    %93 = vmatprep.subr.bf16.mxu0 0
    %94 = vmatpush1.bf16.msra.mxu0 0
    %95 = vmatprep.subr.bf16.mxu0 0
    %96 = vmatpush1.bf16.msra.mxu0 0
    %97 = vmatprep.subr.bf16.mxu0 0
    %98 = vmatpush1.bf16.msra.mxu0 0
    %99 = vmatprep.subr.bf16.mxu0 0
    %100 = vmatpush1.bf16.msra.mxu0 0
    %101 = vmatprep.subr.bf16.mxu0 0
    %102 = vmatpush1.bf16.msra.mxu0 0
    %103 = vmatprep.subr.bf16.mxu0 0
    %104 = vmatpush1.bf16.msra.mxu0 0
    %105 = vmatprep.subr.bf16.mxu0 0
    %106 = vmatpush1.bf16.msra.mxu0 0
    %107 = vmatprep.subr.bf16.mxu0 0
    %108 = vmatpush1.bf16.msra.mxu0 0
    %109 = vmatprep.subr.bf16.mxu0 0
    %110 = vmatpush1.bf16.msra.mxu0 0
    %111 = vmatprep.mubr.bf16.mxu0 0
    %112 = vmatmul.mubr.bf16.gmra.mrb[0].mxu0 %v77
    %v113 = vpop.f32.mrb[0].mxu0
    %v114 = vadd.f32 %v67, %v113
    %v115 = vpop.f32.mrb[0].mxu0
    %v116 = vpop.f32.mrb[0].mxu0
    %v117 = vpop.f32.mrb[0].mxu0
    %118 = vdwg.mxu0
    %v119 = vmax.f32 %v114, 0.0
    %v120 = vpack.c.bf16 %v119, %v119
    %v121 = vld [vmem:[%s3] sm:$0xf]
    %v122 = vld [vmem:[%s3 + $0x4] sm:$0xf]
    %v123 = vld [vmem:[%s3 + $0x8] sm:$0xf]
    %v124 = vld [vmem:[%s3 + $0xc] sm:$0xf]
    %v125 = vld [vmem:[%s3 + $0x10] sm:$0xf]
    %v126 = vld [vmem:[%s3 + $0x14] sm:$0xf]
    %v127 = vld [vmem:[%s3 + $0x18] sm:$0xf]
    %v128 = vld [vmem:[%s3 + $0x1c] sm:$0xf]
    %v129 = vld [vmem:[#allocation5] sm:$0x1]
    %v131 = vlaneseq
    %v132 = vshrl.u32 %v131, 7
    %v133 = vsub.s32 0, %v132
    %v134 = vrot.slane %v129, %v133
    %v144 = vunpack.c.l.b16 %v121
    %v145 = vunpack.c.l.b16 %v122
    %v146 = vunpack.c.l.b16 %v123
    %v147 = vunpack.c.l.b16 %v124
    %v148 = vunpack.c.l.b16 %v125
    %v149 = vunpack.c.l.b16 %v126
    %v150 = vunpack.c.l.b16 %v127
    %v151 = vunpack.c.l.b16 %v128
    %v152 = vpack.c.b16 %v145, %v144
    %v153 = vpack.c.b16 %v147, %v146
    %v154 = vpack.c.b16 %v149, %v148
    %v155 = vpack.c.b16 %v151, %v150
    %vm160 = vcmask 523264
    %v162 = vsel %vm160, %v120, 0
    %164 = vmatprep.subr.bf16.mxu0 0
    %165 = vmatpush1.bf16.msra.mxu0 %v152
    %166 = vmatprep.subr.bf16.mxu0 0
    %167 = vmatpush1.bf16.msra.mxu0 %v153
    %168 = vmatprep.subr.bf16.mxu0 0
    %169 = vmatpush1.bf16.msra.mxu0 %v154
    %170 = vmatprep.subr.bf16.mxu0 0
    %171 = vmatpush1.bf16.msra.mxu0 %v155
    %172 = vmatprep.subr.bf16.mxu0 0
    %173 = vmatpush1.bf16.msra.mxu0 0
    %174 = vmatprep.subr.bf16.mxu0 0
    %175 = vmatpush1.bf16.msra.mxu0 0
    %176 = vmatprep.subr.bf16.mxu0 0
    %177 = vmatpush1.bf16.msra.mxu0 0
    %178 = vmatprep.subr.bf16.mxu0 0
    %179 = vmatpush1.bf16.msra.mxu0 0
    %180 = vmatprep.subr.bf16.mxu0 0
    %181 = vmatpush1.bf16.msra.mxu0 0
    %182 = vmatprep.subr.bf16.mxu0 0
    %183 = vmatpush1.bf16.msra.mxu0 0
    %184 = vmatprep.subr.bf16.mxu0 0
    %185 = vmatpush1.bf16.msra.mxu0 0
    %186 = vmatprep.subr.bf16.mxu0 0
    %187 = vmatpush1.bf16.msra.mxu0 0
    %188 = vmatprep.subr.bf16.mxu0 0
    %189 = vmatpush1.bf16.msra.mxu0 0
    %190 = vmatprep.subr.bf16.mxu0 0
    %191 = vmatpush1.bf16.msra.mxu0 0
    %192 = vmatprep.subr.bf16.mxu0 0
    %193 = vmatpush1.bf16.msra.mxu0 0
    %194 = vmatprep.subr.bf16.mxu0 0
    %195 = vmatpush1.bf16.msra.mxu0 0
    %196 = vmatprep.mubr.bf16.mxu0 0
    %197 = vmatmul.mubr.bf16.gmra.mrb[0].mxu0 %v162
    %v198 = vpop.f32.mrb[0].mxu0
    %v199 = vadd.f32 %v134, %v198
    %v200 = vpop.f32.mrb[0].mxu0
    %v201 = vpop.f32.mrb[0].mxu0
    %v202 = vpop.f32.mrb[0].mxu0
    %203 = vdwg.mxu0
    %v204 = vmax.f32 %v199, 0.0
    %v205 = vpack.c.bf16 %v204, %v204
    %v206 = vld [vmem:[%s5] sm:$0xff]
    %v207 = vld [vmem:[%s5 + $0x8] sm:$0xff]
    %v208 = vld [vmem:[%s5 + $0x10] sm:$0xff]
    %v209 = vld [vmem:[%s5 + $0x18] sm:$0xff]
    %v210 = vld [vmem:[%s5 + $0x20] sm:$0xff]
    %v211 = vld [vmem:[%s5 + $0x28] sm:$0xff]
    %v212 = vld [vmem:[%s5 + $0x30] sm:$0xff]
    %v213 = vld [vmem:[%s5 + $0x38] sm:$0xff]
    %v214 = vld [vmem:[%s5 + $0x40] sm:$0xff]
    %v215 = vld [vmem:[%s5 + $0x48] sm:$0xff]
    %v216 = vld [vmem:[%s5 + $0x50] sm:$0xff]
    %v217 = vld [vmem:[%s5 + $0x58] sm:$0xff]
    %v218 = vld [vmem:[%s5 + $0x60] sm:$0xff]
    %v219 = vld [vmem:[%s5 + $0x68] sm:$0xff]
    %v220 = vld [vmem:[%s5 + $0x70] sm:$0xff]
    %v221 = vld [vmem:[%s5 + $0x78] sm:$0xff]
    %v222 = vld [vmem:[%s6] sm:$0x3]
    %v224 = vlaneseq
    %v225 = vshrl.u32 %v224, 7
    %v226 = vsub.s32 0, %v225
    %v227 = vrot.slane %v222, %v226
    %v228 = vlaneseq
    %v229 = vshrl.u32 %v228, 7
    %v230 = vsub.s32 1, %v229
    %v231 = vrot.slane %v222, %v230
    %v250 = vunpack.c.l.b16 %v206
    %v251 = vunpack.c.h.b16 %v206
    %v252 = vunpack.c.l.b16 %v207
    %v253 = vunpack.c.h.b16 %v207
    %v254 = vunpack.c.l.b16 %v208
    %v255 = vunpack.c.h.b16 %v208
    %v256 = vunpack.c.l.b16 %v209
    %v257 = vunpack.c.h.b16 %v209
    %v258 = vunpack.c.l.b16 %v210
    %v259 = vunpack.c.h.b16 %v210
    %v260 = vunpack.c.l.b16 %v211
    %v261 = vunpack.c.h.b16 %v211
    %v262 = vunpack.c.l.b16 %v212
    %v263 = vunpack.c.h.b16 %v212
    %v264 = vunpack.c.l.b16 %v213
    %v265 = vunpack.c.h.b16 %v213
    %v266 = vunpack.c.l.b16 %v214
    %v267 = vunpack.c.h.b16 %v214
    %v268 = vunpack.c.l.b16 %v215
    %v269 = vunpack.c.h.b16 %v215
    %v270 = vunpack.c.l.b16 %v216
    %v271 = vunpack.c.h.b16 %v216
    %v272 = vunpack.c.l.b16 %v217
    %v273 = vunpack.c.h.b16 %v217
    %v274 = vunpack.c.l.b16 %v218
    %v275 = vunpack.c.h.b16 %v218
    %v276 = vunpack.c.l.b16 %v219
    %v277 = vunpack.c.h.b16 %v219
    %v278 = vunpack.c.l.b16 %v220
    %v279 = vunpack.c.h.b16 %v220
    %v280 = vunpack.c.l.b16 %v221
    %v281 = vunpack.c.h.b16 %v221
    %v282 = vpack.c.b16 %v252, %v250
    %v283 = vpack.c.b16 %v253, %v251
    %v284 = vpack.c.b16 %v256, %v254
    %v285 = vpack.c.b16 %v257, %v255
    %v286 = vpack.c.b16 %v260, %v258
    %v287 = vpack.c.b16 %v261, %v259
    %v288 = vpack.c.b16 %v264, %v262
    %v289 = vpack.c.b16 %v265, %v263
    %v290 = vpack.c.b16 %v268, %v266
    %v291 = vpack.c.b16 %v269, %v267
    %v292 = vpack.c.b16 %v272, %v270
    %v293 = vpack.c.b16 %v273, %v271
    %v294 = vpack.c.b16 %v276, %v274
    %v295 = vpack.c.b16 %v277, %v275
    %v296 = vpack.c.b16 %v280, %v278
    %v297 = vpack.c.b16 %v281, %v279
    %314 = vmatprep.subr.bf16.mxu0 %v283
    %315 = vmatpush1.bf16.msra.mxu0 %v282
    %316 = vmatprep.subr.bf16.mxu0 %v285
    %317 = vmatpush1.bf16.msra.mxu0 %v284
    %318 = vmatprep.subr.bf16.mxu0 %v287
    %319 = vmatpush1.bf16.msra.mxu0 %v286
    %320 = vmatprep.subr.bf16.mxu0 %v289
    %321 = vmatpush1.bf16.msra.mxu0 %v288
    %322 = vmatprep.subr.bf16.mxu0 %v291
    %323 = vmatpush1.bf16.msra.mxu0 %v290
    %324 = vmatprep.subr.bf16.mxu0 %v293
    %325 = vmatpush1.bf16.msra.mxu0 %v292
    %326 = vmatprep.subr.bf16.mxu0 %v295
    %327 = vmatpush1.bf16.msra.mxu0 %v294
    %328 = vmatprep.subr.bf16.mxu0 %v297
    %329 = vmatpush1.bf16.msra.mxu0 %v296
    %330 = vmatprep.subr.bf16.mxu0 0
    %331 = vmatpush1.bf16.msra.mxu0 0
    %332 = vmatprep.subr.bf16.mxu0 0
    %333 = vmatpush1.bf16.msra.mxu0 0
    %334 = vmatprep.subr.bf16.mxu0 0
    %335 = vmatpush1.bf16.msra.mxu0 0
    %336 = vmatprep.subr.bf16.mxu0 0
    %337 = vmatpush1.bf16.msra.mxu0 0
    %338 = vmatprep.subr.bf16.mxu0 0
    %339 = vmatpush1.bf16.msra.mxu0 0
    %340 = vmatprep.subr.bf16.mxu0 0
    %341 = vmatpush1.bf16.msra.mxu0 0
    %342 = vmatprep.subr.bf16.mxu0 0
    %343 = vmatpush1.bf16.msra.mxu0 0
    %344 = vmatprep.subr.bf16.mxu0 0
    %345 = vmatpush1.bf16.msra.mxu0 0
    %346 = vmatprep.mubr.bf16.mxu0 0
    %347 = vmatmul.mubr.bf16.gmra.mrb[0].mxu0 %v205
    %v348 = vpop.f32.mrb[0].mxu0
    %v349 = vadd.f32 %v227, %v348
    %v350 = vpop.f32.mrb[0].mxu0
    %v351 = vadd.f32 %v231, %v350
    %v352 = vpop.f32.mrb[0].mxu0
    %v353 = vpop.f32.mrb[0].mxu0
    %354 = vdwg.mxu0
    %v355 = vmax.f32 %v349, 0.0
    %v356 = vmax.f32 %v351, 0.0
    %v357 = vpack.c.bf16 %v355, %v355
    %v358 = vpack.c.bf16 %v356, %v356
    %v359 = vld [vmem:[%s7] sm:$0xf]
    %v360 = vld [vmem:[%s7 + $0x4] sm:$0xf]
    %v361 = vld [vmem:[%s7 + $0x8] sm:$0xf]
    %v362 = vld [vmem:[%s7 + $0xc] sm:$0xf]
    %v363 = vld [vmem:[%s7 + $0x10] sm:$0xf]
    %v364 = vld [vmem:[%s7 + $0x14] sm:$0xf]
    %v365 = vld [vmem:[%s7 + $0x18] sm:$0xf]
    %v366 = vld [vmem:[%s7 + $0x1c] sm:$0xf]
    %v367 = vld [vmem:[%s7 + $0x20] sm:$0xf]
    %v368 = vld [vmem:[%s7 + $0x24] sm:$0xf]
    %v369 = vld [vmem:[%s7 + $0x28] sm:$0xf]
    %v370 = vld [vmem:[%s7 + $0x2c] sm:$0xf]
    %v371 = vld [vmem:[%s7 + $0x30] sm:$0xf]
    %v372 = vld [vmem:[%s7 + $0x34] sm:$0xf]
    %v373 = vld [vmem:[%s7 + $0x38] sm:$0xf]
    %v374 = vld [vmem:[%s7 + $0x3c] sm:$0xf]
    %v375 = vld [vmem:[%s7 + $0x40] sm:$0xf]
    %v376 = vld [vmem:[%s7 + $0x44] sm:$0xf]
    %v377 = vld [vmem:[%s7 + $0x48] sm:$0xf]
    %v378 = vld [vmem:[%s7 + $0x4c] sm:$0xf]
    %v379 = vld [vmem:[%s7 + $0x50] sm:$0xf]
    %v380 = vld [vmem:[%s7 + $0x54] sm:$0xf]
    %v381 = vld [vmem:[%s7 + $0x58] sm:$0xf]
    %v382 = vld [vmem:[%s7 + $0x5c] sm:$0xf]
    %v383 = vld [vmem:[%s7 + $0x60] sm:$0xf]
    %v384 = vld [vmem:[%s7 + $0x64] sm:$0xf]
    %v385 = vld [vmem:[%s7 + $0x68] sm:$0xf]
    %v386 = vld [vmem:[%s7 + $0x6c] sm:$0xf]
    %v387 = vld [vmem:[%s7 + $0x70] sm:$0xf]
    %v388 = vld [vmem:[%s7 + $0x74] sm:$0xf]
    %v389 = vld [vmem:[%s7 + $0x78] sm:$0xf]
    %v390 = vld [vmem:[%s7 + $0x7c] sm:$0xf]
    %v391 = vld [vmem:[%s8] sm:$0x1]
    %v393 = vlaneseq
    %v394 = vshrl.u32 %v393, 7
    %v395 = vsub.s32 0, %v394
    %v396 = vrot.slane %v391, %v395
    %v430 = vunpack.c.l.b16 %v359
    %v431 = vunpack.c.l.b16 %v360
    %v432 = vunpack.c.l.b16 %v361
    %v433 = vunpack.c.l.b16 %v362
    %v434 = vunpack.c.l.b16 %v363
    %v435 = vunpack.c.l.b16 %v364
    %v436 = vunpack.c.l.b16 %v365
    %v437 = vunpack.c.l.b16 %v366
    %v438 = vunpack.c.l.b16 %v367
    %v439 = vunpack.c.l.b16 %v368
    %v440 = vunpack.c.l.b16 %v369
    %v441 = vunpack.c.l.b16 %v370
    %v442 = vunpack.c.l.b16 %v371
    %v443 = vunpack.c.l.b16 %v372
    %v444 = vunpack.c.l.b16 %v373
    %v445 = vunpack.c.l.b16 %v374
    %v446 = vunpack.c.l.b16 %v375
    %v447 = vunpack.c.l.b16 %v376
    %v448 = vunpack.c.l.b16 %v377
    %v449 = vunpack.c.l.b16 %v378
    %v450 = vunpack.c.l.b16 %v379
    %v451 = vunpack.c.l.b16 %v380
    %v452 = vunpack.c.l.b16 %v381
    %v453 = vunpack.c.l.b16 %v382
    %v454 = vunpack.c.l.b16 %v383
    %v455 = vunpack.c.l.b16 %v384
    %v456 = vunpack.c.l.b16 %v385
    %v457 = vunpack.c.l.b16 %v386
    %v458 = vunpack.c.l.b16 %v387
    %v459 = vunpack.c.l.b16 %v388
    %v460 = vunpack.c.l.b16 %v389
    %v461 = vunpack.c.l.b16 %v390
    %v462 = vpack.c.b16 %v431, %v430
    %v463 = vpack.c.b16 %v433, %v432
    %v464 = vpack.c.b16 %v435, %v434
    %v465 = vpack.c.b16 %v437, %v436
    %v466 = vpack.c.b16 %v439, %v438
    %v467 = vpack.c.b16 %v441, %v440
    %v468 = vpack.c.b16 %v443, %v442
    %v469 = vpack.c.b16 %v445, %v444
    %v470 = vpack.c.b16 %v447, %v446
    %v471 = vpack.c.b16 %v449, %v448
    %v472 = vpack.c.b16 %v451, %v450
    %v473 = vpack.c.b16 %v453, %v452
    %v474 = vpack.c.b16 %v455, %v454
    %v475 = vpack.c.b16 %v457, %v456
    %v476 = vpack.c.b16 %v459, %v458
    %v477 = vpack.c.b16 %v461, %v460
    %494 = vmatprep.subr.bf16.mxu0 0
    %495 = vmatpush1.bf16.msra.mxu0 %v462
    %496 = vmatprep.subr.bf16.mxu0 0
    %497 = vmatpush1.bf16.msra.mxu0 %v463
    %498 = vmatprep.subr.bf16.mxu0 0
    %499 = vmatpush1.bf16.msra.mxu0 %v464
    %500 = vmatprep.subr.bf16.mxu0 0
    %501 = vmatpush1.bf16.msra.mxu0 %v465
    %502 = vmatprep.subr.bf16.mxu0 0
    %503 = vmatpush1.bf16.msra.mxu0 %v466
    %504 = vmatprep.subr.bf16.mxu0 0
    %505 = vmatpush1.bf16.msra.mxu0 %v467
    %506 = vmatprep.subr.bf16.mxu0 0
    %507 = vmatpush1.bf16.msra.mxu0 %v468
    %508 = vmatprep.subr.bf16.mxu0 0
    %509 = vmatpush1.bf16.msra.mxu0 %v469
    %510 = vmatprep.subr.bf16.mxu0 0
    %511 = vmatpush1.bf16.msra.mxu0 %v470
    %512 = vmatprep.subr.bf16.mxu0 0
    %513 = vmatpush1.bf16.msra.mxu0 %v471
    %514 = vmatprep.subr.bf16.mxu0 0
    %515 = vmatpush1.bf16.msra.mxu0 %v472
    %516 = vmatprep.subr.bf16.mxu0 0
    %517 = vmatpush1.bf16.msra.mxu0 %v473
    %518 = vmatprep.subr.bf16.mxu0 0
    %519 = vmatpush1.bf16.msra.mxu0 %v474
    %520 = vmatprep.subr.bf16.mxu0 0
    %521 = vmatpush1.bf16.msra.mxu0 %v475
    %522 = vmatprep.subr.bf16.mxu0 0
    %523 = vmatpush1.bf16.msra.mxu0 %v476
    %524 = vmatprep.subr.bf16.mxu0 0
    %525 = vmatpush1.bf16.msra.mxu0 %v477
    %526 = vmatprep.mubr.bf16.mxu0 %v358
    %527 = vmatmul.mubr.bf16.gmra.mrb[0].mxu0 %v357
    %v528 = vpop.f32.mrb[0].mxu0
    %v529 = vadd.f32 %v396, %v528
    %v530 = vpop.f32.mrb[0].mxu0
    %v531 = vpop.f32.mrb[0].mxu0
    %v532 = vpop.f32.mrb[0].mxu0
    %533 = vdwg.mxu0
    %v534 = vmax.f32 %v529, 0.0
    %vm535 = vcmask 261120
    %536 = vst.msk [vmem:[#allocation7] sm:$0xff] %vm535, %v534
    // Predicated region
    $region46: #{decoder_forward.1} parent=1 // pred_check
      _
    $region47: #{decoder_forward.1} parent=1 // pred_check_branch
      %538 = sbr.rel (0) target = $region49
    $region48: #{decoder_forward.1} parent=1 // pred_region
      %s540 = ssub.s32 128, 128
      %541 = vsyncadd [#allocation4], %s540
      %s543 = sshll.u32 [#allocation7], 4
      %s544 = int_to_ptr.vmem [resolvable:$true] %s543
      %546 = dma.vmem_to_hbm [thread:$0]  %s544, 128, %s9, [#allocation4]
    $region49: #{decoder_forward.1} parent=1 // pred_fallthru
      _
    // Predicated region
    $region50: #{decoder_forward.1} parent=1 // pred_check
      _
    $region51: #{decoder_forward.1} parent=1 // pred_check_branch
      %548 = sbr.rel (0) target = $region53
    $region52: #{decoder_forward.1} parent=1 // pred_region
      %549 = dma.done [#allocation4], 128
    $region53: #{decoder_forward.1} parent=1 // pred_fallthru
      _
    %550 = vsyncpa [#allocation3], 1
    %551 = vsyncpa [#allocation6], 1
    %552 = vsyncpa [#allocation4], 1

</llo_original>
